<compile_context>
chip_gen: v5e
topology: v5e:2x2
jax: 0.10.0
libtpu: 0.0.40
codegen_flags: <defaults>
</compile_context>

<pallas_src>
import jax
import jax.numpy as jnp
from jax.experimental import pallas as pl
from jax.experimental.pallas import tpu as pltpu


# ---------------------------------------------------------------------------
# Pallas kernel: fused  W(Cout,K) @ P^T(K,tm) + bias -> ReLU   (lane-dense out)
# ---------------------------------------------------------------------------
def _conv_mm_relu_kernel(w_ref, b_ref, pT_ref, o_ref):
    # w_ref : (Cout, K)   flattened conv weight (resident, constant block index)
    # b_ref : (Cout, 1)   bias column, broadcast along the lane (M) axis
    # pT_ref: (K, tm)     transposed patches tile: K on sublanes, M on lanes
    # o_ref : (Cout, tm)  lane-dense output tile
    acc = jnp.dot(w_ref[...], pT_ref[...], preferred_element_type=jnp.float32)
    o_ref[...] = jnp.maximum(acc + b_ref[...], 0.0).astype(o_ref.dtype)


def _conv_mm_relu(w_flat, bias_col, patches_t, *, tm_max=1024):
    """w_flat: (Cout, K), bias_col: (Cout, 1), patches_t: (K, M) -> (Cout, M)."""
    cout, kdim = w_flat.shape
    m = patches_t.shape[1]
    # Biggest M tile that comfortably fits VMEM: one step when M is small, else
    # 1024-wide (multiple of 128) tiles so every store is an unmasked full-lane vst.
    tm = m if m <= tm_max else tm_max
    grid = (pl.cdiv(m, tm),)
    return pl.pallas_call(
        _conv_mm_relu_kernel,
        out_shape=jax.ShapeDtypeStruct((cout, m), jnp.float32),
        grid_spec=pltpu.PrefetchScalarGridSpec(
            num_scalar_prefetch=0,
            grid=grid,
            in_specs=[
                pl.BlockSpec((cout, kdim), lambda i: (0, 0)),  # weight (resident)
                pl.BlockSpec((cout, 1), lambda i: (0, 0)),     # bias   (resident)
                pl.BlockSpec((kdim, tm), lambda i: (0, i)),    # patches^T tile
            ],
            out_specs=pl.BlockSpec((cout, tm), lambda i: (0, i)),
        ),
        compiler_params=pltpu.CompilerParams(
            # Independent M tiles -> megacore sharding on v7x; neutral on v5e/v6e.
            dimension_semantics=("parallel",),
            vmem_limit_bytes=32 * 1024 * 1024,
        ),
    )(w_flat, bias_col, patches_t)


# ---------------------------------------------------------------------------
# im2col (plain-JAX glue) producing the *transposed* patch matrix directly:
#   P^T[(c*16 + ki*4 + kj), (n*Ho*Wo + ho*Wo + wo)] = x_pad[n, c, 2*ho+ki, 2*wo+kj]
# Matches PyTorch Conv2d(k=4, stride=2, padding=1) and weight.reshape(Cout, -1).
# ---------------------------------------------------------------------------
def _im2col_t(x, k=4, stride=2, pad=1):
    n, c, h, w = x.shape
    xp = jnp.pad(x, ((0, 0), (0, 0), (pad, pad), (pad, pad)))
    ho = (h + 2 * pad - k) // stride + 1
    wo = (w + 2 * pad - k) // stride + 1
    taps = []
    for ki in range(k):
        for kj in range(k):
            taps.append(
                xp[:, :, ki : ki + stride * ho : stride, kj : kj + stride * wo : stride]
            )
    p = jnp.stack(taps, axis=2)                   # (N, C, k*k, Ho, Wo)
    p = p.reshape(n, c * k * k, ho * wo)          # (N, K, Ho*Wo), K-rows = c*16+ki*4+kj
    p = p.transpose(1, 0, 2).reshape(c * k * k, n * ho * wo)  # (K, M), M on lanes
    # TODO(synk): stream the patch extraction inside the Pallas kernel (strided
    # VMEM loads of the padded input) to remove the 16x-amplified HBM intermediate.
    return p, ho, wo


# ---------------------------------------------------------------------------
# Encoder forward (Conv2d + ReLU), NCHW in / NCHW out
# ---------------------------------------------------------------------------
@jax.jit
def encoder_forward(x, weight, bias):
    # x: (N, C_in, H, W); weight: (C_out, C_in, 4, 4); bias: (C_out,)
    n = x.shape[0]
    cout = weight.shape[0]
    patches_t, ho, wo = _im2col_t(x, k=4, stride=2, pad=1)
    w_flat = weight.reshape(cout, -1)     # (Cout, C_in*16), row order (c, ki, kj)
    b_col = bias.reshape(cout, 1)
    y = _conv_mm_relu(w_flat, b_col, patches_t)   # (Cout, N*Ho*Wo), lane-dense
    # Only a small leading-axis transpose remains to get back to NCHW.
    return y.reshape(cout, n, ho, wo).transpose(1, 0, 2, 3)


# ---------------------------------------------------------------------------
# main
# ---------------------------------------------------------------------------
if __name__ == "__main__":
    key = jax.random.PRNGKey(0)
    k_x, k_w, k_b = jax.random.split(key, 3)

    # Small, module-consistent shapes: batch=2, input_channels=4, hidden=8, spatial=16
    N, C_IN, C_HID, H, W = 2, 4, 8, 16, 16

    x = jax.random.normal(k_x, (N, C_IN, H, W), dtype=jnp.float32)
    fan_in = C_IN * 4 * 4
    bound = 1.0 / (fan_in ** 0.5)
    weight = jax.random.uniform(k_w, (C_HID, C_IN, 4, 4), jnp.float32, -bound, bound)
    bias = jax.random.uniform(k_b, (C_HID,), jnp.float32, -bound, bound)

    out = encoder_forward(x, weight, bias)
    out = jax.block_until_ready(out)

    # Sanity check against XLA's native conv (same semantics as torch Conv2d + ReLU).
    ref = jax.lax.conv_general_dilated(
        x, weight, window_strides=(2, 2), padding=((1, 1), (1, 1)),
        dimension_numbers=("NCHW", "OIHW", "NCHW"),
        precision=jax.lax.Precision.HIGHEST,
    ) + bias.reshape(1, C_HID, 1, 1)
    ref = jnp.maximum(ref, 0.0)

    assert out.shape == (N, C_HID, H // 2, W // 2), out.shape
    err = float(jnp.max(jnp.abs(out - ref)))
    # Tolerance covers any MXU f32-matmul pass-count regime across v5e/v6e/v7x.
    assert jnp.allclose(out, ref, atol=2e-2, rtol=2e-3), f"max abs err = {err}"

    print("KERNEL_OK")
</pallas_src>

<mosaic_0001>
module attributes {stable_mosaic.version = 11 : i64} {
  func.func @_conv_mm_relu_kernel(%arg0: i32, %arg1: memref<8x64xf32, #tpu.memory_space<vmem>>, %arg2: memref<8x1xf32, #tpu.memory_space<vmem>>, %arg3: memref<64x128xf32, #tpu.memory_space<vmem>>, %arg4: memref<8x128xf32, #tpu.memory_space<vmem>>) attributes {dimension_semantics = [#tpu.dimension_semantics<parallel>], iteration_bounds = array<i64: 1>, scalar_prefetch = 0 : i64, scratch_operands = 0 : i64, tpu.core_type = #tpu.core_type<tc>, window_params = [{pipeline_mode = #tpu.pipeline_mode<synchronous>, transform_indices = @transform_0, window_bounds = array<i64: 8, 64>}, {pipeline_mode = #tpu.pipeline_mode<synchronous>, transform_indices = @transform_1, window_bounds = array<i64: 8, 1>}, {transform_indices = @transform_2, window_bounds = array<i64: 64, 128>}, {transform_indices = @transform_3, window_bounds = array<i64: 8, 128>}]} {
    %c0 = arith.constant 0 : index
    %c0_0 = arith.constant 0 : index
    %0 = vector.load %arg1[%c0, %c0_0] : memref<8x64xf32, #tpu.memory_space<vmem>>, vector<8x64xf32>
    %c0_1 = arith.constant 0 : index
    %c0_2 = arith.constant 0 : index
    %1 = vector.load %arg3[%c0_1, %c0_2] : memref<64x128xf32, #tpu.memory_space<vmem>>, vector<64x128xf32>
    %cst = arith.constant dense<0.000000e+00> : vector<8x128xf32>
    %2 = tpu.matmul %0, %1, %cst {dimension_numbers = #tpu.dot_dimension_numbers<[1], [0], [0], [1], [0, 0, 1, 1], [], []>} : vector<8x64xf32>, vector<64x128xf32>, vector<8x128xf32> -> vector<8x128xf32>
    %c0_3 = arith.constant 0 : index
    %c0_4 = arith.constant 0 : index
    %3 = vector.load %arg2[%c0_3, %c0_4] : memref<8x1xf32, #tpu.memory_space<vmem>>, vector<8x1xf32>
    %4 = vector.broadcast %3 : vector<8x1xf32> to vector<8x128xf32>
    %5 = arith.addf %2, %4 : vector<8x128xf32>
    %cst_5 = arith.constant 0.000000e+00 : f32
    %6 = vector.broadcast %cst_5 : f32 to vector<8x128xf32>
    %7 = arith.maximumf %5, %6 : vector<8x128xf32>
    %c0_6 = arith.constant 0 : index
    %c0_7 = arith.constant 0 : index
    %8 = vector.load %arg4[%c0_6, %c0_7] : memref<8x128xf32, #tpu.memory_space<vmem>>, vector<8x128xf32>
    tpu.vector_store %arg4[%c0_6, %c0_7], %7 {strides = array<i32>} : memref<8x128xf32, #tpu.memory_space<vmem>>, vector<8x128xf32>,
    return
  }
  func.func @transform_0(%arg0: i32) -> (i32, i32) {
    %c0_i32 = arith.constant 0 : i32
    %c0_i32_0 = arith.constant 0 : i32
    %c0_i32_1 = arith.constant 0 : i32
    return %c0_i32, %c0_i32_0 : i32, i32
  }
  func.func @transform_1(%arg0: i32) -> (i32, i32) {
    %c0_i32 = arith.constant 0 : i32
    %c0_i32_0 = arith.constant 0 : i32
    %c0_i32_1 = arith.constant 0 : i32
    return %c0_i32, %c0_i32_0 : i32, i32
  }
  func.func @transform_2(%arg0: i32) -> (i32, i32) {
    %c0_i32 = arith.constant 0 : i32
    %c0_i32_0 = arith.constant 0 : i32
    return %c0_i32, %arg0 : i32, i32
  }
  func.func @transform_3(%arg0: i32) -> (i32, i32) {
    %c0_i32 = arith.constant 0 : i32
    %c0_i32_0 = arith.constant 0 : i32
    return %c0_i32, %arg0 : i32, i32
  }
}

</mosaic_0001>

<llo_original>
// kernel: encoder_forward.1
$region0: #{encoder_forward.1}
  #allocation0 [shape = 'u32[]', space=smem, size = 0x4, offset = 0x4, fixed_abs, tag = 'smem constant byte address 0x4 - core index']
  #allocation1 [shape = 'u32[72,128]{1,0:T(1,128)}', space=vmem, size = 0x9000, scoped, tag = 'internal scratch']
  %s0 = inlined_call_operand.vmem [shape: f32[8,64], index: 0, kind: input, shape index: {}]
  %s1 = inlined_call_operand.vmem [shape: f32[8,1], index: 1, kind: input, shape index: {}]
  %s2 = inlined_call_operand.vmem [shape: f32[64,128], index: 2, kind: input, shape index: {}]
  %s3 = inlined_call_operand.vmem [shape: f32[8,128], index: 3, kind: output, shape index: {}]
  %s4 = sld [smem:[#allocation0]]
  $region22: #{encoder_forward.1} parent=0
    _
  %s6 = ssub.s32 1, %s4
  %s7 = scalar_select 0, %s6, %s4
  // Predicated region
  $region2: #{encoder_forward.1} parent=0 // pred_check
    _
  $region3: #{encoder_forward.1} parent=0 // pred_check_branch
    %9 = sbr.rel (0) target = $region5
  $region4: #{encoder_forward.1} parent=0 // pred_region
    _
  $region5: #{encoder_forward.1} parent=0 // pred_fallthru
    _
  // Predicated region
  $region6: #{encoder_forward.1} parent=0 // pred_check
    _
  $region7: #{encoder_forward.1} parent=0 // pred_check_branch
    %11 = sbr.rel (0) target = $region9
  $region8: #{encoder_forward.1} parent=0 // pred_region
    _
  $region9: #{encoder_forward.1} parent=0 // pred_fallthru
    _
  // Predicated region
  $region10: #{encoder_forward.1} parent=0 // pred_check
    _
  $region11: #{encoder_forward.1} parent=0 // pred_check_branch
    %13 = sbr.rel (0) target = $region13
  $region12: #{encoder_forward.1} parent=0 // pred_region
    _
  $region13: #{encoder_forward.1} parent=0 // pred_fallthru
    _
  %v14 = vld [vmem:[%s0] sm:$0xff]
  %v15 = vld [vmem:[%s2] sm:$0xff]
  %v16 = vld [vmem:[%s2 + $0x8] sm:$0xff]
  %v17 = vld [vmem:[%s2 + $0x10] sm:$0xff]
  %v18 = vld [vmem:[%s2 + $0x18] sm:$0xff]
  %v19 = vld [vmem:[%s2 + $0x20] sm:$0xff]
  %v20 = vld [vmem:[%s2 + $0x28] sm:$0xff]
  %v21 = vld [vmem:[%s2 + $0x30] sm:$0xff]
  %v22 = vld [vmem:[%s2 + $0x38] sm:$0xff]
  %v23 = vld [vmem:[%s1] sm:$0xff]
  %25 = vset.pattern.permute.xlu0 0
  %26 = vperm.xlu0 %25, %v23
  %v27 = vpop.permute.xlu0 %26
  %vm29 = vcmask 523264
  %v31 = vsel %vm29, %v14, 0
  %33 = vmatpush.msra.mxu0 0.0
  %34 = vmatpush.msra.mxu0 0.0
  %35 = vmatpush.msra.mxu0 0.0
  %36 = vmatpush.msra.mxu0 0.0
  %37 = vmatpush.msra.mxu0 0.0
  %38 = vmatpush.msra.mxu0 0.0
  %39 = vmatpush.msra.mxu0 0.0
  %40 = vmatpush.msra.mxu0 0.0
  %41 = vmatpush.msra.mxu0 %v22
  %42 = vmatpush.msra.mxu0 %v21
  %43 = vmatpush.msra.mxu0 %v20
  %44 = vmatpush.msra.mxu0 %v19
  %45 = vmatpush.msra.mxu0 %v18
  %46 = vmatpush.msra.mxu0 %v17
  %47 = vmatpush.msra.mxu0 %v16
  %48 = vmatpush.msra.mxu0 %v15
  %49 = vmatmul.f32.gmra.mxu0 %v31
  %v50 = vpop.f32.mrf.mxu0
  %v51 = vadd.f32 %v27, %v50
  %52 = vdwg.mxu0
  %v53 = vmax.f32 %v51, 0.0
  %54 = vst [vmem:[%s3] sm:$0xff] %v53
  // Predicated region
  $region14: #{encoder_forward.1} parent=0 // pred_check
    _
  $region15: #{encoder_forward.1} parent=0 // pred_check_branch
    %56 = sbr.rel (0) target = $region17
  $region16: #{encoder_forward.1} parent=0 // pred_region
    _
  $region17: #{encoder_forward.1} parent=0 // pred_fallthru
    _
  // Predicated region
  $region18: #{encoder_forward.1} parent=0 // pred_check
    _
  $region19: #{encoder_forward.1} parent=0 // pred_check_branch
    %58 = sbr.rel (0) target = $region21
  $region20: #{encoder_forward.1} parent=0 // pred_region
    _
  $region21: #{encoder_forward.1} parent=0 // pred_fallthru
    _

</llo_original>
